<compile_context>
chip_gen: v5e
topology: v5e:2x2
jax: 0.10.0
libtpu: 0.0.40
codegen_flags: <defaults>
</compile_context>

<pallas_src>
import functools

import jax
import jax.numpy as jnp
from jax.experimental import pallas as pl
from jax.experimental.pallas import tpu as pltpu


# ---------------------------------------------------------------------------
# One-time parameter fold (offline, amortized over all forward calls):
#   ((x - mean) / std) @ W + b  ==  x @ W' + b'
# ---------------------------------------------------------------------------
def fold_normalization(mean_c, std_c, w, b, spatial, *, compute_dtype=jnp.bfloat16):
    """mean_c/std_c: [C]; w: [C*spatial, NCLS]; b: [NCLS]; NCHW flatten order.

    Returns (w_folded [K, NCLS] in compute_dtype, b_folded [1, NCLS] f32) — the
    final kernel-ready parameters; no per-call pad/cast of weights is needed.
    """
    mean_c = mean_c.astype(jnp.float32)
    inv_std_c = 1.0 / std_c.astype(jnp.float32)
    mean_k = jnp.repeat(mean_c, spatial)          # [K], matches reshape(B, C*H*W)
    inv_std_k = jnp.repeat(inv_std_c, spatial)    # [K]
    w32 = w.astype(jnp.float32)
    w_folded = (w32 * inv_std_k[:, None]).astype(compute_dtype)      # [K, NCLS]
    b_folded = b.astype(jnp.float32) - (mean_k * inv_std_k) @ w32    # [NCLS]
    return w_folded, b_folded.reshape(1, -1)


# ---------------------------------------------------------------------------
# Kernels
# ---------------------------------------------------------------------------
def _single_pass_kernel(x_ref, w_ref, b_ref, out_ref):
    """One MXU pass per M tile: out = x @ W' + b' (x cast to weight dtype here)."""
    xv = x_ref[...].astype(w_ref.dtype)
    out_ref[...] = (
        jnp.dot(xv, w_ref[...], preferred_element_type=jnp.float32) + b_ref[...]
    ).astype(out_ref.dtype)


def _kblocked_kernel(x_ref, w_ref, b_ref, out_ref, *, tk, w_resident):
    """K-blocked path: accumulate directly into the K-invariant f32 out block."""
    k = pl.program_id(1)

    @pl.when(k == 0)
    def _():
        out_ref[...] = jnp.broadcast_to(b_ref[...], out_ref.shape).astype(out_ref.dtype)

    if w_resident:
        # Whole W' lives in VMEM (constant index map => DMA'd once); slice it.
        start = pl.multiple_of(k * tk, tk)
        w_tile = w_ref[pl.ds(start, tk), :]
    else:
        w_tile = w_ref[...]
    xv = x_ref[...].astype(w_tile.dtype)
    out_ref[...] += jnp.dot(xv, w_tile, preferred_element_type=jnp.float32)


# ---------------------------------------------------------------------------
# Forward wrapper
# ---------------------------------------------------------------------------
_SINGLE_PASS_VMEM_BUDGET = 20 * 1024 * 1024   # stay well under the 32 MiB scoped default
_RESIDENT_W_BUDGET = 12 * 1024 * 1024         # double-buffered resident W' budget


def normalized_model_forward(x_nchw, w_folded, b_folded, *, tk_target=2048):
    """x_nchw: [B,C,H,W] float; w_folded: [K, NCLS]; b_folded: [1, NCLS] f32."""
    B, C, H, W = x_nchw.shape
    K, NCLS = w_folded.shape
    assert K == C * H * W, "weight K must match C*H*W"

    x_flat = x_nchw.reshape(B, K)   # free reshape; no pad, no cast (cast is in-kernel)

    x_bytes = jnp.dtype(x_flat.dtype).itemsize
    w_bytes = jnp.dtype(w_folded.dtype).itemsize

    # M tiling: small batches use the full (legal) B as the block; large use 128.
    TM = B if B <= 128 else 128
    num_m = pl.cdiv(B, TM)

    # ---- fast path: no K blocking, W' resident, single pipelined pass --------
    single_pass_vmem = 2 * (TM * K * x_bytes + K * NCLS * w_bytes + TM * NCLS * 4)
    if single_pass_vmem <= _SINGLE_PASS_VMEM_BUDGET:
        return pl.pallas_call(
            _single_pass_kernel,
            out_shape=jax.ShapeDtypeStruct((B, NCLS), jnp.float32),
            grid=(num_m,),
            in_specs=[
                pl.BlockSpec((TM, K), lambda i: (i, 0)),       # x tile (full K)
                pl.BlockSpec((K, NCLS), lambda i: (0, 0)),     # W' (constant -> one DMA)
                pl.BlockSpec((1, NCLS), lambda i: (0, 0)),     # b'
            ],
            out_specs=pl.BlockSpec((TM, NCLS), lambda i: (i, 0)),
            compiler_params=pltpu.CompilerParams(
                dimension_semantics=("parallel",)),
        )(x_flat, w_folded, b_folded)

    # ---- K-blocked path (large K) --------------------------------------------
    # TODO(synk): support K that is not a multiple of 128 (requires a one-time
    #             offline K-pad of W'; never pad x per call).
    assert K % 128 == 0, "K-blocked path requires K % 128 == 0"
    TK = 128
    for cand in range(min(tk_target, K), 127, -128):   # largest 128-multiple dividing K
        if K % cand == 0:
            TK = cand
            break
    num_k = K // TK

    w_resident = 2 * K * NCLS * w_bytes <= _RESIDENT_W_BUDGET
    if w_resident:
        w_spec = pl.BlockSpec((K, NCLS), lambda i, k: (0, 0))    # DMA'd once per call
    else:
        w_spec = pl.BlockSpec((TK, NCLS), lambda i, k: (k, 0))   # streamed per K step

    kernel = functools.partial(_kblocked_kernel, tk=TK, w_resident=w_resident)
    return pl.pallas_call(
        kernel,
        out_shape=jax.ShapeDtypeStruct((B, NCLS), jnp.float32),
        grid=(num_m, num_k),
        in_specs=[
            pl.BlockSpec((TM, TK), lambda i, k: (i, k)),
            w_spec,
            pl.BlockSpec((1, NCLS), lambda i, k: (0, 0)),
        ],
        out_specs=pl.BlockSpec((TM, NCLS), lambda i, k: (i, 0)),
        compiler_params=pltpu.CompilerParams(
            dimension_semantics=("parallel", "arbitrary")),
    )(x_flat, w_folded, b_folded)


# ---------------------------------------------------------------------------
# Demo / correctness check
# ---------------------------------------------------------------------------
if __name__ == "__main__":
    key = jax.random.PRNGKey(0)
    kx, kw, kb = jax.random.split(key, 3)

    B, C, H, W = 2, 4, 16, 16
    NCLS = 16
    K = C * H * W

    x = jax.random.normal(kx, (B, C, H, W), dtype=jnp.float32)
    # deterministic dataset statistics (per-channel, like CIFAR means)
    mean_c = jnp.array([0.4914, 0.4822, 0.4465, 0.5000], dtype=jnp.float32)
    std_c = jnp.array([0.2470, 0.2435, 0.2616, 0.2500], dtype=jnp.float32)
    # deterministic inner "model" parameters (simple linear head)
    w = jax.random.normal(kw, (K, NCLS), dtype=jnp.float32) * 0.02
    b = jax.random.normal(kb, (NCLS,), dtype=jnp.float32) * 0.01

    # one-time parameter fold (offline; bf16 weight stream, f32 bias)
    w_folded, b_folded = fold_normalization(mean_c, std_c, w, b, H * W)
    w_folded, b_folded = jax.block_until_ready((w_folded, b_folded))

    out = normalized_model_forward(x, w_folded, b_folded)
    out = jax.block_until_ready(out)

    # reference: original (un-folded) module math in plain JAX f32
    norm_ref = (x - mean_c.reshape(1, C, 1, 1)) / std_c.reshape(1, C, 1, 1)
    ref = norm_ref.reshape(B, K) @ w + b
    assert out.shape == (B, NCLS)
    # tolerance loosened vs the f32 reference because the weight stream is bf16
    assert jnp.allclose(out, ref, atol=1.5e-1, rtol=5e-2), "mismatch vs reference"

    print("KERNEL_OK")
</pallas_src>

<mosaic_0001>
module attributes {stable_mosaic.version = 11 : i64} {
  func.func @_single_pass_kernel(%arg0: i32, %arg1: memref<2x1024xf32, #tpu.memory_space<vmem>>, %arg2: memref<1024x16xbf16, #tpu.memory_space<vmem>>, %arg3: memref<1x16xf32, #tpu.memory_space<vmem>>, %arg4: memref<2x16xf32, #tpu.memory_space<vmem>>) attributes {dimension_semantics = [#tpu.dimension_semantics<parallel>], iteration_bounds = array<i64: 1>, scalar_prefetch = 0 : i64, scratch_operands = 0 : i64, tpu.core_type = #tpu.core_type<tc>, window_params = [{transform_indices = @transform_0, window_bounds = array<i64: 2, 1024>}, {pipeline_mode = #tpu.pipeline_mode<synchronous>, transform_indices = @transform_1, window_bounds = array<i64: 1024, 16>}, {pipeline_mode = #tpu.pipeline_mode<synchronous>, transform_indices = @transform_2, window_bounds = array<i64: 1, 16>}, {transform_indices = @transform_3, window_bounds = array<i64: 2, 16>}]} {
    %c0 = arith.constant 0 : index
    %c0_0 = arith.constant 0 : index
    %0 = vector.load %arg1[%c0, %c0_0] : memref<2x1024xf32, #tpu.memory_space<vmem>>, vector<2x1024xf32>
    %1 = arith.truncf %0 : vector<2x1024xf32> to vector<2x1024xbf16>
    %c0_1 = arith.constant 0 : index
    %c0_2 = arith.constant 0 : index
    %2 = vector.load %arg2[%c0_1, %c0_2] : memref<1024x16xbf16, #tpu.memory_space<vmem>>, vector<1024x16xbf16>
    %cst = arith.constant dense<0.000000e+00> : vector<2x16xf32>
    %3 = tpu.matmul %1, %2, %cst {dimension_numbers = #tpu.dot_dimension_numbers<[1], [0], [0], [1], [0, 0, 1, 1], [], []>} : vector<2x1024xbf16>, vector<1024x16xbf16>, vector<2x16xf32> -> vector<2x16xf32>
    %c0_3 = arith.constant 0 : index
    %c0_4 = arith.constant 0 : index
    %4 = vector.load %arg3[%c0_3, %c0_4] : memref<1x16xf32, #tpu.memory_space<vmem>>, vector<1x16xf32>
    %5 = vector.broadcast %4 : vector<1x16xf32> to vector<2x16xf32>
    %6 = arith.addf %3, %5 : vector<2x16xf32>
    %c0_5 = arith.constant 0 : index
    %c0_6 = arith.constant 0 : index
    %7 = vector.load %arg4[%c0_5, %c0_6] : memref<2x16xf32, #tpu.memory_space<vmem>>, vector<2x16xf32>
    tpu.vector_store %arg4[%c0_5, %c0_6], %6 {strides = array<i32>} : memref<2x16xf32, #tpu.memory_space<vmem>>, vector<2x16xf32>,
    return
  }
  func.func @transform_0(%arg0: i32) -> (i32, i32) {
    %c0_i32 = arith.constant 0 : i32
    %c0_i32_0 = arith.constant 0 : i32
    return %arg0, %c0_i32 : i32, i32
  }
  func.func @transform_1(%arg0: i32) -> (i32, i32) {
    %c0_i32 = arith.constant 0 : i32
    %c0_i32_0 = arith.constant 0 : i32
    %c0_i32_1 = arith.constant 0 : i32
    return %c0_i32, %c0_i32_0 : i32, i32
  }
  func.func @transform_2(%arg0: i32) -> (i32, i32) {
    %c0_i32 = arith.constant 0 : i32
    %c0_i32_0 = arith.constant 0 : i32
    %c0_i32_1 = arith.constant 0 : i32
    return %c0_i32, %c0_i32_0 : i32, i32
  }
  func.func @transform_3(%arg0: i32) -> (i32, i32) {
    %c0_i32 = arith.constant 0 : i32
    %c0_i32_0 = arith.constant 0 : i32
    return %arg0, %c0_i32 : i32, i32
  }
}

</mosaic_0001>

<llo_original>
// kernel: tpu_custom_call.1
$region0: #{tpu_custom_call.1}
  #allocation0 [shape = 'u32[]', space=smem, size = 0x4, offset = 0x4, fixed_abs, tag = 'smem constant byte address 0x4 - core index']
  #allocation1 [shape = 'u32[72,128]{1,0:T(1,128)}', space=vmem, size = 0x9000, scoped, tag = 'internal scratch']
  %s0 = inlined_call_operand.vmem [shape: f32[2,1024], index: 0, kind: input, shape index: {}]
  %s1 = inlined_call_operand.vmem [shape: bf16[1024,16], index: 1, kind: input, shape index: {}]
  %s2 = inlined_call_operand.vmem [shape: f32[1,16], index: 2, kind: input, shape index: {}]
  %s3 = inlined_call_operand.hbm [shape: f32[2,16], index: 3, kind: output, shape index: {}]
  %s4 = sld [smem:[#allocation0]]
  $region22: #{tpu_custom_call.1} parent=0
    _
  %s6 = ssub.s32 1, %s4
  %s7 = scalar_select 0, %s6, %s4
  $region1: #{tpu_custom_call.1} parent=0
    #allocation2 [shape = 'u8[1024]{0}', space=vmem, size = 0x400, scoped, tag = 'output window, operand 0, single buffered']
    #allocation3 [shape = 's32[1]{0}', space=sflag, size = 0x4, scoped, tag = 'scoped memory for tpu_custom_call.1']
    %8 = vsyncpa [#allocation3], 0
    // Predicated region
    $region2: #{tpu_custom_call.1} parent=1 // pred_check
      _
    $region3: #{tpu_custom_call.1} parent=1 // pred_check_branch
      %10 = sbr.rel (0) target = $region5
    $region4: #{tpu_custom_call.1} parent=1 // pred_region
      _
    $region5: #{tpu_custom_call.1} parent=1 // pred_fallthru
      _
    // Predicated region
    $region6: #{tpu_custom_call.1} parent=1 // pred_check
      _
    $region7: #{tpu_custom_call.1} parent=1 // pred_check_branch
      %12 = sbr.rel (0) target = $region9
    $region8: #{tpu_custom_call.1} parent=1 // pred_region
      _
    $region9: #{tpu_custom_call.1} parent=1 // pred_fallthru
      _
    // Predicated region
    $region10: #{tpu_custom_call.1} parent=1 // pred_check
      _
    $region11: #{tpu_custom_call.1} parent=1 // pred_check_branch
      %14 = sbr.rel (0) target = $region13
    $region12: #{tpu_custom_call.1} parent=1 // pred_region
      _
    $region13: #{tpu_custom_call.1} parent=1 // pred_fallthru
      _
    %v15 = vld [vmem:[%s0] sm:$0xff]
    %v16 = vld [vmem:[%s0 + $0x8] sm:$0xff]
    %19 = vst [vmem:[#allocation1] ss:$4 sm:$0xff] %v15
    %s20 = scalar_lea.vmem [#allocation1], 32
    %21 = vst [vmem:[%s20] ss:$4 sm:$0xff] %v16
    %v22 = vld.sshfl [vmem:[#allocation1] sm:$0xff pattern:$0x73625140]
    %v23 = vld.sshfl [vmem:[#allocation1 + $0x8] sm:$0xff pattern:$0x73625140]
    %v24 = vld.sshfl [vmem:[#allocation1 + $0x10] sm:$0xff pattern:$0x73625140]
    %v25 = vld.sshfl [vmem:[#allocation1 + $0x18] sm:$0xff pattern:$0x73625140]
    %v26 = vld.sshfl [vmem:[#allocation1 + $0x20] sm:$0xff pattern:$0x73625140]
    %v27 = vld.sshfl [vmem:[#allocation1 + $0x28] sm:$0xff pattern:$0x73625140]
    %v28 = vld.sshfl [vmem:[#allocation1 + $0x30] sm:$0xff pattern:$0x73625140]
    %v29 = vld.sshfl [vmem:[#allocation1 + $0x38] sm:$0xff pattern:$0x73625140]
    %v38 = vpack.c.bf16 %v22, %v22
    %v39 = vpack.c.bf16 %v23, %v23
    %v40 = vpack.c.bf16 %v24, %v24
    %v41 = vpack.c.bf16 %v25, %v25
    %v42 = vpack.c.bf16 %v26, %v26
    %v43 = vpack.c.bf16 %v27, %v27
    %v44 = vpack.c.bf16 %v28, %v28
    %v45 = vpack.c.bf16 %v29, %v29
    %v46 = vld [vmem:[%s1] sm:$0xf]
    %v47 = vld [vmem:[%s1 + $0x4] sm:$0xf]
    %v48 = vld [vmem:[%s1 + $0x8] sm:$0xf]
    %v49 = vld [vmem:[%s1 + $0xc] sm:$0xf]
    %v50 = vld [vmem:[%s1 + $0x10] sm:$0xf]
    %v51 = vld [vmem:[%s1 + $0x14] sm:$0xf]
    %v52 = vld [vmem:[%s1 + $0x18] sm:$0xf]
    %v53 = vld [vmem:[%s1 + $0x1c] sm:$0xf]
    %v54 = vld [vmem:[%s1 + $0x20] sm:$0xf]
    %v55 = vld [vmem:[%s1 + $0x24] sm:$0xf]
    %v56 = vld [vmem:[%s1 + $0x28] sm:$0xf]
    %v57 = vld [vmem:[%s1 + $0x2c] sm:$0xf]
    %v58 = vld [vmem:[%s1 + $0x30] sm:$0xf]
    %v59 = vld [vmem:[%s1 + $0x34] sm:$0xf]
    %v60 = vld [vmem:[%s1 + $0x38] sm:$0xf]
    %v61 = vld [vmem:[%s1 + $0x3c] sm:$0xf]
    %v62 = vld [vmem:[%s1 + $0x40] sm:$0xf]
    %v63 = vld [vmem:[%s1 + $0x44] sm:$0xf]
    %v64 = vld [vmem:[%s1 + $0x48] sm:$0xf]
    %v65 = vld [vmem:[%s1 + $0x4c] sm:$0xf]
    %v66 = vld [vmem:[%s1 + $0x50] sm:$0xf]
    %v67 = vld [vmem:[%s1 + $0x54] sm:$0xf]
    %v68 = vld [vmem:[%s1 + $0x58] sm:$0xf]
    %v69 = vld [vmem:[%s1 + $0x5c] sm:$0xf]
    %v70 = vld [vmem:[%s1 + $0x60] sm:$0xf]
    %v71 = vld [vmem:[%s1 + $0x64] sm:$0xf]
    %v72 = vld [vmem:[%s1 + $0x68] sm:$0xf]
    %v73 = vld [vmem:[%s1 + $0x6c] sm:$0xf]
    %v74 = vld [vmem:[%s1 + $0x70] sm:$0xf]
    %v75 = vld [vmem:[%s1 + $0x74] sm:$0xf]
    %v76 = vld [vmem:[%s1 + $0x78] sm:$0xf]
    %v77 = vld [vmem:[%s1 + $0x7c] sm:$0xf]
    %v78 = vld [vmem:[%s1 + $0x80] sm:$0xf]
    %v79 = vld [vmem:[%s1 + $0x84] sm:$0xf]
    %v80 = vld [vmem:[%s1 + $0x88] sm:$0xf]
    %v81 = vld [vmem:[%s1 + $0x8c] sm:$0xf]
    %v82 = vld [vmem:[%s1 + $0x90] sm:$0xf]
    %v83 = vld [vmem:[%s1 + $0x94] sm:$0xf]
    %v84 = vld [vmem:[%s1 + $0x98] sm:$0xf]
    %v85 = vld [vmem:[%s1 + $0x9c] sm:$0xf]
    %v86 = vld [vmem:[%s1 + $0xa0] sm:$0xf]
    %v87 = vld [vmem:[%s1 + $0xa4] sm:$0xf]
    %v88 = vld [vmem:[%s1 + $0xa8] sm:$0xf]
    %v89 = vld [vmem:[%s1 + $0xac] sm:$0xf]
    %v90 = vld [vmem:[%s1 + $0xb0] sm:$0xf]
    %v91 = vld [vmem:[%s1 + $0xb4] sm:$0xf]
    %v92 = vld [vmem:[%s1 + $0xb8] sm:$0xf]
    %v93 = vld [vmem:[%s1 + $0xbc] sm:$0xf]
    %v94 = vld [vmem:[%s1 + $0xc0] sm:$0xf]
    %v95 = vld [vmem:[%s1 + $0xc4] sm:$0xf]
    %v96 = vld [vmem:[%s1 + $0xc8] sm:$0xf]
    %v97 = vld [vmem:[%s1 + $0xcc] sm:$0xf]
    %v98 = vld [vmem:[%s1 + $0xd0] sm:$0xf]
    %v99 = vld [vmem:[%s1 + $0xd4] sm:$0xf]
    %v100 = vld [vmem:[%s1 + $0xd8] sm:$0xf]
    %v101 = vld [vmem:[%s1 + $0xdc] sm:$0xf]
    %v102 = vld [vmem:[%s1 + $0xe0] sm:$0xf]
    %v103 = vld [vmem:[%s1 + $0xe4] sm:$0xf]
    %v104 = vld [vmem:[%s1 + $0xe8] sm:$0xf]
    %v105 = vld [vmem:[%s1 + $0xec] sm:$0xf]
    %v106 = vld [vmem:[%s1 + $0xf0] sm:$0xf]
    %v107 = vld [vmem:[%s1 + $0xf4] sm:$0xf]
    %v108 = vld [vmem:[%s1 + $0xf8] sm:$0xf]
    %v109 = vld [vmem:[%s1 + $0xfc] sm:$0xf]
    %v110 = vld [vmem:[%s1 + $0x100] sm:$0xf]
    %v111 = vld [vmem:[%s1 + $0x104] sm:$0xf]
    %v112 = vld [vmem:[%s1 + $0x108] sm:$0xf]
    %v113 = vld [vmem:[%s1 + $0x10c] sm:$0xf]
    %v114 = vld [vmem:[%s1 + $0x110] sm:$0xf]
    %v115 = vld [vmem:[%s1 + $0x114] sm:$0xf]
    %v116 = vld [vmem:[%s1 + $0x118] sm:$0xf]
    %v117 = vld [vmem:[%s1 + $0x11c] sm:$0xf]
    %v118 = vld [vmem:[%s1 + $0x120] sm:$0xf]
    %v119 = vld [vmem:[%s1 + $0x124] sm:$0xf]
    %v120 = vld [vmem:[%s1 + $0x128] sm:$0xf]
    %v121 = vld [vmem:[%s1 + $0x12c] sm:$0xf]
    %v122 = vld [vmem:[%s1 + $0x130] sm:$0xf]
    %v123 = vld [vmem:[%s1 + $0x134] sm:$0xf]
    %v124 = vld [vmem:[%s1 + $0x138] sm:$0xf]
    %v125 = vld [vmem:[%s1 + $0x13c] sm:$0xf]
    %v126 = vld [vmem:[%s1 + $0x140] sm:$0xf]
    %v127 = vld [vmem:[%s1 + $0x144] sm:$0xf]
    %v128 = vld [vmem:[%s1 + $0x148] sm:$0xf]
    %v129 = vld [vmem:[%s1 + $0x14c] sm:$0xf]
    %v130 = vld [vmem:[%s1 + $0x150] sm:$0xf]
    %v131 = vld [vmem:[%s1 + $0x154] sm:$0xf]
    %v132 = vld [vmem:[%s1 + $0x158] sm:$0xf]
    %v133 = vld [vmem:[%s1 + $0x15c] sm:$0xf]
    %v134 = vld [vmem:[%s1 + $0x160] sm:$0xf]
    %v135 = vld [vmem:[%s1 + $0x164] sm:$0xf]
    %v136 = vld [vmem:[%s1 + $0x168] sm:$0xf]
    %v137 = vld [vmem:[%s1 + $0x16c] sm:$0xf]
    %v138 = vld [vmem:[%s1 + $0x170] sm:$0xf]
    %v139 = vld [vmem:[%s1 + $0x174] sm:$0xf]
    %v140 = vld [vmem:[%s1 + $0x178] sm:$0xf]
    %v141 = vld [vmem:[%s1 + $0x17c] sm:$0xf]
    %v142 = vld [vmem:[%s1 + $0x180] sm:$0xf]
    %v143 = vld [vmem:[%s1 + $0x184] sm:$0xf]
    %v144 = vld [vmem:[%s1 + $0x188] sm:$0xf]
    %v145 = vld [vmem:[%s1 + $0x18c] sm:$0xf]
    %v146 = vld [vmem:[%s1 + $0x190] sm:$0xf]
    %v147 = vld [vmem:[%s1 + $0x194] sm:$0xf]
    %v148 = vld [vmem:[%s1 + $0x198] sm:$0xf]
    %v149 = vld [vmem:[%s1 + $0x19c] sm:$0xf]
    %v150 = vld [vmem:[%s1 + $0x1a0] sm:$0xf]
    %v151 = vld [vmem:[%s1 + $0x1a4] sm:$0xf]
    %v152 = vld [vmem:[%s1 + $0x1a8] sm:$0xf]
    %v153 = vld [vmem:[%s1 + $0x1ac] sm:$0xf]
    %v154 = vld [vmem:[%s1 + $0x1b0] sm:$0xf]
    %v155 = vld [vmem:[%s1 + $0x1b4] sm:$0xf]
    %v156 = vld [vmem:[%s1 + $0x1b8] sm:$0xf]
    %v157 = vld [vmem:[%s1 + $0x1bc] sm:$0xf]
    %v158 = vld [vmem:[%s1 + $0x1c0] sm:$0xf]
    %v159 = vld [vmem:[%s1 + $0x1c4] sm:$0xf]
    %v160 = vld [vmem:[%s1 + $0x1c8] sm:$0xf]
    %v161 = vld [vmem:[%s1 + $0x1cc] sm:$0xf]
    %v162 = vld [vmem:[%s1 + $0x1d0] sm:$0xf]
    %v163 = vld [vmem:[%s1 + $0x1d4] sm:$0xf]
    %v164 = vld [vmem:[%s1 + $0x1d8] sm:$0xf]
    %v165 = vld [vmem:[%s1 + $0x1dc] sm:$0xf]
    %v166 = vld [vmem:[%s1 + $0x1e0] sm:$0xf]
    %v167 = vld [vmem:[%s1 + $0x1e4] sm:$0xf]
    %v168 = vld [vmem:[%s1 + $0x1e8] sm:$0xf]
    %v169 = vld [vmem:[%s1 + $0x1ec] sm:$0xf]
    %v170 = vld [vmem:[%s1 + $0x1f0] sm:$0xf]
    %v171 = vld [vmem:[%s1 + $0x1f4] sm:$0xf]
    %v172 = vld [vmem:[%s1 + $0x1f8] sm:$0xf]
    %v173 = vld [vmem:[%s1 + $0x1fc] sm:$0xf]
    %v174 = vld [vmem:[%s2] sm:$0x1]
    %v176 = vperm.slane %v174, 0
    %v306 = vunpack.c.l.b16 %v46
    %v307 = vunpack.c.l.b16 %v47
    %v308 = vunpack.c.l.b16 %v48
    %v309 = vunpack.c.l.b16 %v49
    %v310 = vunpack.c.l.b16 %v50
    %v311 = vunpack.c.l.b16 %v51
    %v312 = vunpack.c.l.b16 %v52
    %v313 = vunpack.c.l.b16 %v53
    %v314 = vunpack.c.l.b16 %v54
    %v315 = vunpack.c.l.b16 %v55
    %v316 = vunpack.c.l.b16 %v56
    %v317 = vunpack.c.l.b16 %v57
    %v318 = vunpack.c.l.b16 %v58
    %v319 = vunpack.c.l.b16 %v59
    %v320 = vunpack.c.l.b16 %v60
    %v321 = vunpack.c.l.b16 %v61
    %v322 = vunpack.c.l.b16 %v62
    %v323 = vunpack.c.l.b16 %v63
    %v324 = vunpack.c.l.b16 %v64
    %v325 = vunpack.c.l.b16 %v65
    %v326 = vunpack.c.l.b16 %v66
    %v327 = vunpack.c.l.b16 %v67
    %v328 = vunpack.c.l.b16 %v68
    %v329 = vunpack.c.l.b16 %v69
    %v330 = vunpack.c.l.b16 %v70
    %v331 = vunpack.c.l.b16 %v71
    %v332 = vunpack.c.l.b16 %v72
    %v333 = vunpack.c.l.b16 %v73
    %v334 = vunpack.c.l.b16 %v74
    %v335 = vunpack.c.l.b16 %v75
    %v336 = vunpack.c.l.b16 %v76
    %v337 = vunpack.c.l.b16 %v77
    %v338 = vunpack.c.l.b16 %v78
    %v339 = vunpack.c.l.b16 %v79
    %v340 = vunpack.c.l.b16 %v80
    %v341 = vunpack.c.l.b16 %v81
    %v342 = vunpack.c.l.b16 %v82
    %v343 = vunpack.c.l.b16 %v83
    %v344 = vunpack.c.l.b16 %v84
    %v345 = vunpack.c.l.b16 %v85
    %v346 = vunpack.c.l.b16 %v86
    %v347 = vunpack.c.l.b16 %v87
    %v348 = vunpack.c.l.b16 %v88
    %v349 = vunpack.c.l.b16 %v89
    %v350 = vunpack.c.l.b16 %v90
    %v351 = vunpack.c.l.b16 %v91
    %v352 = vunpack.c.l.b16 %v92
    %v353 = vunpack.c.l.b16 %v93
    %v354 = vunpack.c.l.b16 %v94
    %v355 = vunpack.c.l.b16 %v95
    %v356 = vunpack.c.l.b16 %v96
    %v357 = vunpack.c.l.b16 %v97
    %v358 = vunpack.c.l.b16 %v98
    %v359 = vunpack.c.l.b16 %v99
    %v360 = vunpack.c.l.b16 %v100
    %v361 = vunpack.c.l.b16 %v101
    %v362 = vunpack.c.l.b16 %v102
    %v363 = vunpack.c.l.b16 %v103
    %v364 = vunpack.c.l.b16 %v104
    %v365 = vunpack.c.l.b16 %v105
    %v366 = vunpack.c.l.b16 %v106
    %v367 = vunpack.c.l.b16 %v107
    %v368 = vunpack.c.l.b16 %v108
    %v369 = vunpack.c.l.b16 %v109
    %v370 = vunpack.c.l.b16 %v110
    %v371 = vunpack.c.l.b16 %v111
    %v372 = vunpack.c.l.b16 %v112
    %v373 = vunpack.c.l.b16 %v113
    %v374 = vunpack.c.l.b16 %v114
    %v375 = vunpack.c.l.b16 %v115
    %v376 = vunpack.c.l.b16 %v116
    %v377 = vunpack.c.l.b16 %v117
    %v378 = vunpack.c.l.b16 %v118
    %v379 = vunpack.c.l.b16 %v119
    %v380 = vunpack.c.l.b16 %v120
    %v381 = vunpack.c.l.b16 %v121
    %v382 = vunpack.c.l.b16 %v122
    %v383 = vunpack.c.l.b16 %v123
    %v384 = vunpack.c.l.b16 %v124
    %v385 = vunpack.c.l.b16 %v125
    %v386 = vunpack.c.l.b16 %v126
    %v387 = vunpack.c.l.b16 %v127
    %v388 = vunpack.c.l.b16 %v128
    %v389 = vunpack.c.l.b16 %v129
    %v390 = vunpack.c.l.b16 %v130
    %v391 = vunpack.c.l.b16 %v131
    %v392 = vunpack.c.l.b16 %v132
    %v393 = vunpack.c.l.b16 %v133
    %v394 = vunpack.c.l.b16 %v134
    %v395 = vunpack.c.l.b16 %v135
    %v396 = vunpack.c.l.b16 %v136
    %v397 = vunpack.c.l.b16 %v137
    %v398 = vunpack.c.l.b16 %v138
    %v399 = vunpack.c.l.b16 %v139
    %v400 = vunpack.c.l.b16 %v140
    %v401 = vunpack.c.l.b16 %v141
    %v402 = vunpack.c.l.b16 %v142
    %v403 = vunpack.c.l.b16 %v143
    %v404 = vunpack.c.l.b16 %v144
    %v405 = vunpack.c.l.b16 %v145
    %v406 = vunpack.c.l.b16 %v146
    %v407 = vunpack.c.l.b16 %v147
    %v408 = vunpack.c.l.b16 %v148
    %v409 = vunpack.c.l.b16 %v149
    %v410 = vunpack.c.l.b16 %v150
    %v411 = vunpack.c.l.b16 %v151
    %v412 = vunpack.c.l.b16 %v152
    %v413 = vunpack.c.l.b16 %v153
    %v414 = vunpack.c.l.b16 %v154
    %v415 = vunpack.c.l.b16 %v155
    %v416 = vunpack.c.l.b16 %v156
    %v417 = vunpack.c.l.b16 %v157
    %v418 = vunpack.c.l.b16 %v158
    %v419 = vunpack.c.l.b16 %v159
    %v420 = vunpack.c.l.b16 %v160
    %v421 = vunpack.c.l.b16 %v161
    %v422 = vunpack.c.l.b16 %v162
    %v423 = vunpack.c.l.b16 %v163
    %v424 = vunpack.c.l.b16 %v164
    %v425 = vunpack.c.l.b16 %v165
    %v426 = vunpack.c.l.b16 %v166
    %v427 = vunpack.c.l.b16 %v167
    %v428 = vunpack.c.l.b16 %v168
    %v429 = vunpack.c.l.b16 %v169
    %v430 = vunpack.c.l.b16 %v170
    %v431 = vunpack.c.l.b16 %v171
    %v432 = vunpack.c.l.b16 %v172
    %v433 = vunpack.c.l.b16 %v173
    %v434 = vpack.c.b16 %v307, %v306
    %v435 = vpack.c.b16 %v309, %v308
    %v436 = vpack.c.b16 %v311, %v310
    %v437 = vpack.c.b16 %v313, %v312
    %v438 = vpack.c.b16 %v315, %v314
    %v439 = vpack.c.b16 %v317, %v316
    %v440 = vpack.c.b16 %v319, %v318
    %v441 = vpack.c.b16 %v321, %v320
    %v442 = vpack.c.b16 %v323, %v322
    %v443 = vpack.c.b16 %v325, %v324
    %v444 = vpack.c.b16 %v327, %v326
    %v445 = vpack.c.b16 %v329, %v328
    %v446 = vpack.c.b16 %v331, %v330
    %v447 = vpack.c.b16 %v333, %v332
    %v448 = vpack.c.b16 %v335, %v334
    %v449 = vpack.c.b16 %v337, %v336
    %v450 = vpack.c.b16 %v339, %v338
    %v451 = vpack.c.b16 %v341, %v340
    %v452 = vpack.c.b16 %v343, %v342
    %v453 = vpack.c.b16 %v345, %v344
    %v454 = vpack.c.b16 %v347, %v346
    %v455 = vpack.c.b16 %v349, %v348
    %v456 = vpack.c.b16 %v351, %v350
    %v457 = vpack.c.b16 %v353, %v352
    %v458 = vpack.c.b16 %v355, %v354
    %v459 = vpack.c.b16 %v357, %v356
    %v460 = vpack.c.b16 %v359, %v358
    %v461 = vpack.c.b16 %v361, %v360
    %v462 = vpack.c.b16 %v363, %v362
    %v463 = vpack.c.b16 %v365, %v364
    %v464 = vpack.c.b16 %v367, %v366
    %v465 = vpack.c.b16 %v369, %v368
    %v466 = vpack.c.b16 %v371, %v370
    %v467 = vpack.c.b16 %v373, %v372
    %v468 = vpack.c.b16 %v375, %v374
    %v469 = vpack.c.b16 %v377, %v376
    %v470 = vpack.c.b16 %v379, %v378
    %v471 = vpack.c.b16 %v381, %v380
    %v472 = vpack.c.b16 %v383, %v382
    %v473 = vpack.c.b16 %v385, %v384
    %v474 = vpack.c.b16 %v387, %v386
    %v475 = vpack.c.b16 %v389, %v388
    %v476 = vpack.c.b16 %v391, %v390
    %v477 = vpack.c.b16 %v393, %v392
    %v478 = vpack.c.b16 %v395, %v394
    %v479 = vpack.c.b16 %v397, %v396
    %v480 = vpack.c.b16 %v399, %v398
    %v481 = vpack.c.b16 %v401, %v400
    %v482 = vpack.c.b16 %v403, %v402
    %v483 = vpack.c.b16 %v405, %v404
    %v484 = vpack.c.b16 %v407, %v406
    %v485 = vpack.c.b16 %v409, %v408
    %v486 = vpack.c.b16 %v411, %v410
    %v487 = vpack.c.b16 %v413, %v412
    %v488 = vpack.c.b16 %v415, %v414
    %v489 = vpack.c.b16 %v417, %v416
    %v490 = vpack.c.b16 %v419, %v418
    %v491 = vpack.c.b16 %v421, %v420
    %v492 = vpack.c.b16 %v423, %v422
    %v493 = vpack.c.b16 %v425, %v424
    %v494 = vpack.c.b16 %v427, %v426
    %v495 = vpack.c.b16 %v429, %v428
    %v496 = vpack.c.b16 %v431, %v430
    %v497 = vpack.c.b16 %v433, %v432
    %562 = vmatpush.bf16.msra.mxu0 %v441
    %563 = vmatpush.bf16.msra.mxu0 %v440
    %564 = vmatpush.bf16.msra.mxu0 %v439
    %565 = vmatpush.bf16.msra.mxu0 %v438
    %566 = vmatpush.bf16.msra.mxu0 %v437
    %567 = vmatpush.bf16.msra.mxu0 %v436
    %568 = vmatpush.bf16.msra.mxu0 %v435
    %569 = vmatpush.bf16.msra.mxu0 %v434
    %570 = vmatmul.bf16.gmra.mxu0 %v38
    %v571 = vpop.f32.mrf.mxu0
    %v572 = vadd.f32 %v176, %v571
    %v573 = vpop.f32.mrf.mxu0
    %574 = vdwg.mxu0
    %575 = vmatpush.bf16.msra.mxu0 %v449
    %576 = vmatpush.bf16.msra.mxu0 %v448
    %577 = vmatpush.bf16.msra.mxu0 %v447
    %578 = vmatpush.bf16.msra.mxu0 %v446
    %579 = vmatpush.bf16.msra.mxu0 %v445
    %580 = vmatpush.bf16.msra.mxu0 %v444
    %581 = vmatpush.bf16.msra.mxu0 %v443
    %582 = vmatpush.bf16.msra.mxu0 %v442
    %583 = vmatmul.bf16.gmra.mxu0 %v39
    %v584 = vpop.f32.mrf.mxu0
    %v585 = vadd.f32 %v572, %v584
    %v586 = vpop.f32.mrf.mxu0
    %587 = vdwg.mxu0
    %588 = vmatpush.bf16.msra.mxu0 %v457
    %589 = vmatpush.bf16.msra.mxu0 %v456
    %590 = vmatpush.bf16.msra.mxu0 %v455
    %591 = vmatpush.bf16.msra.mxu0 %v454
    %592 = vmatpush.bf16.msra.mxu0 %v453
    %593 = vmatpush.bf16.msra.mxu0 %v452
    %594 = vmatpush.bf16.msra.mxu0 %v451
    %595 = vmatpush.bf16.msra.mxu0 %v450
    %596 = vmatmul.bf16.gmra.mxu0 %v40
    %v597 = vpop.f32.mrf.mxu0
    %v598 = vadd.f32 %v585, %v597
    %v599 = vpop.f32.mrf.mxu0
    %600 = vdwg.mxu0
    %601 = vmatpush.bf16.msra.mxu0 %v465
    %602 = vmatpush.bf16.msra.mxu0 %v464
    %603 = vmatpush.bf16.msra.mxu0 %v463
    %604 = vmatpush.bf16.msra.mxu0 %v462
    %605 = vmatpush.bf16.msra.mxu0 %v461
    %606 = vmatpush.bf16.msra.mxu0 %v460
    %607 = vmatpush.bf16.msra.mxu0 %v459
    %608 = vmatpush.bf16.msra.mxu0 %v458
    %609 = vmatmul.bf16.gmra.mxu0 %v41
    %v610 = vpop.f32.mrf.mxu0
    %v611 = vadd.f32 %v598, %v610
    %v612 = vpop.f32.mrf.mxu0
    %613 = vdwg.mxu0
    %614 = vmatpush.bf16.msra.mxu0 %v473
    %615 = vmatpush.bf16.msra.mxu0 %v472
    %616 = vmatpush.bf16.msra.mxu0 %v471
    %617 = vmatpush.bf16.msra.mxu0 %v470
    %618 = vmatpush.bf16.msra.mxu0 %v469
    %619 = vmatpush.bf16.msra.mxu0 %v468
    %620 = vmatpush.bf16.msra.mxu0 %v467
    %621 = vmatpush.bf16.msra.mxu0 %v466
    %622 = vmatmul.bf16.gmra.mxu0 %v42
    %v623 = vpop.f32.mrf.mxu0
    %v624 = vadd.f32 %v611, %v623
    %v625 = vpop.f32.mrf.mxu0
    %626 = vdwg.mxu0
    %627 = vmatpush.bf16.msra.mxu0 %v481
    %628 = vmatpush.bf16.msra.mxu0 %v480
    %629 = vmatpush.bf16.msra.mxu0 %v479
    %630 = vmatpush.bf16.msra.mxu0 %v478
    %631 = vmatpush.bf16.msra.mxu0 %v477
    %632 = vmatpush.bf16.msra.mxu0 %v476
    %633 = vmatpush.bf16.msra.mxu0 %v475
    %634 = vmatpush.bf16.msra.mxu0 %v474
    %635 = vmatmul.bf16.gmra.mxu0 %v43
    %v636 = vpop.f32.mrf.mxu0
    %v637 = vadd.f32 %v624, %v636
    %v638 = vpop.f32.mrf.mxu0
    %639 = vdwg.mxu0
    %640 = vmatpush.bf16.msra.mxu0 %v489
    %641 = vmatpush.bf16.msra.mxu0 %v488
    %642 = vmatpush.bf16.msra.mxu0 %v487
    %643 = vmatpush.bf16.msra.mxu0 %v486
    %644 = vmatpush.bf16.msra.mxu0 %v485
    %645 = vmatpush.bf16.msra.mxu0 %v484
    %646 = vmatpush.bf16.msra.mxu0 %v483
    %647 = vmatpush.bf16.msra.mxu0 %v482
    %648 = vmatmul.bf16.gmra.mxu0 %v44
    %v649 = vpop.f32.mrf.mxu0
    %v650 = vadd.f32 %v637, %v649
    %v651 = vpop.f32.mrf.mxu0
    %652 = vdwg.mxu0
    %653 = vmatpush.bf16.msra.mxu0 %v497
    %654 = vmatpush.bf16.msra.mxu0 %v496
    %655 = vmatpush.bf16.msra.mxu0 %v495
    %656 = vmatpush.bf16.msra.mxu0 %v494
    %657 = vmatpush.bf16.msra.mxu0 %v493
    %658 = vmatpush.bf16.msra.mxu0 %v492
    %659 = vmatpush.bf16.msra.mxu0 %v491
    %660 = vmatpush.bf16.msra.mxu0 %v490
    %661 = vmatmul.bf16.gmra.mxu0 %v45
    %v662 = vpop.f32.mrf.mxu0
    %v663 = vadd.f32 %v650, %v662
    %v664 = vpop.f32.mrf.mxu0
    %665 = vdwg.mxu0
    %vm666 = vcmask 123904
    %667 = vst.msk [vmem:[#allocation2] sm:$0x3] %vm666, %v663
    // Predicated region
    $region14: #{tpu_custom_call.1} parent=1 // pred_check
      _
    $region15: #{tpu_custom_call.1} parent=1 // pred_check_branch
      %669 = sbr.rel (0) target = $region17
    $region16: #{tpu_custom_call.1} parent=1 // pred_region
      %671 = vsyncadd [#allocation3], 0
      %s673 = sshll.u32 [#allocation2], 4
      %s674 = int_to_ptr.vmem [resolvable:$true] %s673
      %s675 = sshll.u32 %s3, 4
      %s676 = int_to_ptr.hbm [resolvable:$true] %s675
      %678 = dma.vmem_to_hbm [thread:$0]  %s674, 32, %s676, [#allocation3]
    $region17: #{tpu_custom_call.1} parent=1 // pred_fallthru
      _
    // Predicated region
    $region18: #{tpu_custom_call.1} parent=1 // pred_check
      _
    $region19: #{tpu_custom_call.1} parent=1 // pred_check_branch
      %680 = sbr.rel (0) target = $region21
    $region20: #{tpu_custom_call.1} parent=1 // pred_region
      %682 = dma.done [#allocation3], 32
    $region21: #{tpu_custom_call.1} parent=1 // pred_fallthru
      _
    %683 = vsyncpa [#allocation3], 1

</llo_original>
